<compile_context>
chip_gen: v5e
topology: v5e:2x2
jax: 0.10.0
libtpu: 0.0.40
codegen_flags: <defaults>
</compile_context>

<pallas_src>
import math

import jax
import jax.numpy as jnp
from jax import lax
from jax.experimental import pallas as pl
from jax.experimental.pallas import tpu as pltpu


def _wln_linear_kernel(x_ref, w_ref, b_ref, o_ref, acc_ref):
    # x_ref  : (tile_m, tile_k)  VMEM   activations
    # w_ref  : (tile_n, tile_k)  VMEM   weight (PyTorch layout, NOT transposed)
    # b_ref  : (1, tile_n)       VMEM   bias
    # o_ref  : (tile_m, tile_n)  VMEM   output tile
    # acc_ref: (tile_m, tile_n)  VMEM   f32 accumulator scratch (lives across K)
    k = pl.program_id(2)

    @pl.when(k == 0)
    def _init():
        acc_ref[...] = jnp.zeros_like(acc_ref)

    # Contract the last dim of x with the last dim of w  ==  x @ w.T  (MXU-native).
    acc_ref[...] += lax.dot_general(
        x_ref[...],
        w_ref[...],
        dimension_numbers=(((1,), (1,)), ((), ())),
        preferred_element_type=jnp.float32,
    )

    @pl.when(k == pl.num_programs(2) - 1)
    def _store():
        o_ref[...] = (acc_ref[...] + b_ref[...]).astype(o_ref.dtype)


def _pick_tile(dim, target, align):
    """Largest legal tile <= target: either the full dim or a multiple of `align`."""
    if dim <= target:
        return dim  # full dim is always a legal block size
    return max((target // align) * align, align)


def _pick_k_tile(in_feats, target):
    """K tile must divide in_feats exactly (partial reduction blocks would be wrong)."""
    if in_feats <= target:
        return in_feats
    t = (target // 128) * 128
    while t >= 128:
        if in_feats % t == 0:
            return t
        t -= 128
    return in_feats  # fall back to a single full-K step


def wln_linear(feats, weight, bias=None, *, tile_m=512, tile_n=256, tile_k=512):
    """Applies F.linear(feats, weight, bias) via a Pallas TPU kernel.

    feats  : (N, *, in_feats) float32
    weight : (out_feats, in_feats) float32   (PyTorch layout; no transpose copy made)
    bias   : (out_feats,) float32 or None
    """
    in_feats = feats.shape[-1]
    out_feats = weight.shape[0]
    lead_shape = feats.shape[:-1]
    m = int(math.prod(lead_shape)) if lead_shape else 1

    x2d = feats.reshape(m, in_feats)
    if bias is None:
        b2d = jnp.zeros((1, out_feats), dtype=jnp.float32)
    else:
        b2d = bias.reshape(1, out_feats).astype(jnp.float32)

    tm = _pick_tile(m, tile_m, 8)
    tn = _pick_tile(out_feats, tile_n, 128)
    tk = _pick_k_tile(in_feats, tile_k)

    grid = (pl.cdiv(m, tm), pl.cdiv(out_feats, tn), in_feats // tk)

    # VMEM budget: double-buffered x / w / bias / out tiles + f32 accumulator.
    tile_bytes = 4 * (tm * tk + tn * tk + tn + tm * tn)
    vmem_bytes = 2 * tile_bytes + 4 * tm * tn
    vmem_limit = min(max(int(vmem_bytes * 1.5) + (1 << 20), 32 << 20), 96 << 20)

    cost = pl.CostEstimate(
        flops=2 * m * in_feats * out_feats,
        transcendentals=0,
        bytes_accessed=4 * (m * in_feats + out_feats * in_feats + out_feats + m * out_feats),
    )

    out2d = pl.pallas_call(
        _wln_linear_kernel,
        out_shape=jax.ShapeDtypeStruct((m, out_feats), feats.dtype),
        grid_spec=pltpu.PrefetchScalarGridSpec(
            num_scalar_prefetch=0,
            grid=grid,
            in_specs=[
                pl.BlockSpec((tm, tk), lambda i, j, k: (i, k)),   # activations
                pl.BlockSpec((tn, tk), lambda i, j, k: (j, k)),   # weight (out, in)
                pl.BlockSpec((1, tn), lambda i, j, k: (0, j)),    # bias
            ],
            out_specs=pl.BlockSpec((tm, tn), lambda i, j, k: (i, j)),
            scratch_shapes=[pltpu.VMEM((tm, tn), jnp.float32)],
        ),
        compiler_params=pltpu.CompilerParams(
            dimension_semantics=("parallel", "parallel", "arbitrary"),
            vmem_limit_bytes=vmem_limit,
        ),
        cost_estimate=cost,
    )(x2d, weight, b2d)

    return out2d.reshape(*lead_shape, out_feats)


def init_wln_linear_params(key, in_feats, out_feats, bias=True):
    """Deterministic parameter init matching WLNLinear.reset_parameters."""
    stddev = min(1.0 / math.sqrt(in_feats), 0.1)
    w = stddev * jax.random.normal(key, (out_feats, in_feats), dtype=jnp.float32)
    b = jnp.zeros((out_feats,), dtype=jnp.float32) if bias else None
    return w, b


if __name__ == "__main__":
    key = jax.random.PRNGKey(0)
    k_feat, k_w, k_feat2, k_w2, k_b2 = jax.random.split(key, 5)

    # --- Small shape matching the module docstring: (N, *, in_feats) ---
    in_feats, out_feats = 32, 64
    feats = jax.random.normal(k_feat, (2, 8, in_feats), dtype=jnp.float32)
    weight, bias = init_wln_linear_params(k_w, in_feats, out_feats, bias=True)

    out = wln_linear(feats, weight, bias)
    out = jax.block_until_ready(out)

    ref = feats @ weight.T + bias
    assert out.shape == (2, 8, out_feats)
    assert jnp.allclose(out, ref, atol=1e-5, rtol=1e-5)

    # --- Ragged shape exercising partial M / N tiles (no pad, no weight.T) ---
    in2, out2 = 96, 160
    feats2 = jax.random.normal(k_feat2, (37, in2), dtype=jnp.float32)
    w2 = 0.05 * jax.random.normal(k_w2, (out2, in2), dtype=jnp.float32)
    b2 = 0.1 * jax.random.normal(k_b2, (out2,), dtype=jnp.float32)

    out_b = wln_linear(feats2, w2, b2, tile_m=16, tile_n=128, tile_k=96)
    out_b = jax.block_until_ready(out_b)
    ref_b = feats2 @ w2.T + b2
    assert out_b.shape == (37, out2)
    assert jnp.allclose(out_b, ref_b, atol=1e-4, rtol=1e-4)

    print("KERNEL_OK")
</pallas_src>

<mosaic_0001>
module attributes {stable_mosaic.version = 11 : i64} {
  func.func @_wln_linear_kernel(%arg0: i32, %arg1: i32, %arg2: i32, %arg3: memref<16x32xf32, #tpu.memory_space<vmem>>, %arg4: memref<64x32xf32, #tpu.memory_space<vmem>>, %arg5: memref<1x64xf32, #tpu.memory_space<vmem>>, %arg6: memref<16x64xf32, #tpu.memory_space<vmem>>, %arg7: memref<16x64xf32, #tpu.memory_space<vmem>>) attributes {dimension_semantics = [#tpu.dimension_semantics<parallel>, #tpu.dimension_semantics<parallel>, #tpu.dimension_semantics<arbitrary>], iteration_bounds = array<i64: 1, 1, 1>, scalar_prefetch = 0 : i64, scratch_operands = 1 : i64, tpu.core_type = #tpu.core_type<tc>, window_params = [{transform_indices = @transform_0, window_bounds = array<i64: 16, 32>}, {transform_indices = @transform_1, window_bounds = array<i64: 64, 32>}, {transform_indices = @transform_2, window_bounds = array<i64: 1, 64>}, {transform_indices = @transform_3, window_bounds = array<i64: 16, 64>}]} {
    %c0_i32 = arith.constant 0 : i32
    %0 = arith.cmpi eq, %arg2, %c0_i32 : i32
    %1 = arith.extui %0 : i1 to i32
    %c0_i32_0 = arith.constant 0 : i32
    %2 = arith.cmpi ne, %1, %c0_i32_0 : i32
    scf.if %2 {
      %cst_10 = arith.constant 0.000000e+00 : f32
      %12 = vector.broadcast %cst_10 : f32 to vector<16x64xf32>
      %c0_11 = arith.constant 0 : index
      %c0_12 = arith.constant 0 : index
      %13 = vector.load %arg7[%c0_11, %c0_12] : memref<16x64xf32, #tpu.memory_space<vmem>>, vector<16x64xf32>
      tpu.vector_store %arg7[%c0_11, %c0_12], %12 {strides = array<i32>} : memref<16x64xf32, #tpu.memory_space<vmem>>, vector<16x64xf32>,
    } else {
    }
    %c0 = arith.constant 0 : index
    %c0_1 = arith.constant 0 : index
    %3 = vector.load %arg7[%c0, %c0_1] : memref<16x64xf32, #tpu.memory_space<vmem>>, vector<16x64xf32>
    %c0_2 = arith.constant 0 : index
    %c0_3 = arith.constant 0 : index
    %4 = vector.load %arg3[%c0_2, %c0_3] : memref<16x32xf32, #tpu.memory_space<vmem>>, vector<16x32xf32>
    %c0_4 = arith.constant 0 : index
    %c0_5 = arith.constant 0 : index
    %5 = vector.load %arg4[%c0_4, %c0_5] : memref<64x32xf32, #tpu.memory_space<vmem>>, vector<64x32xf32>
    %cst = arith.constant dense<0.000000e+00> : vector<16x64xf32>
    %6 = tpu.matmul %4, %5, %cst {dimension_numbers = #tpu.dot_dimension_numbers<[1], [1], [0], [0], [0, 0, 1, 0], [], []>} : vector<16x32xf32>, vector<64x32xf32>, vector<16x64xf32> -> vector<16x64xf32>
    %7 = arith.addf %3, %6 : vector<16x64xf32>
    %c0_6 = arith.constant 0 : index
    %c0_7 = arith.constant 0 : index
    %8 = vector.load %arg7[%c0_6, %c0_7] : memref<16x64xf32, #tpu.memory_space<vmem>>, vector<16x64xf32>
    tpu.vector_store %arg7[%c0_6, %c0_7], %7 {strides = array<i32>} : memref<16x64xf32, #tpu.memory_space<vmem>>, vector<16x64xf32>,
    %c0_i32_8 = arith.constant 0 : i32
    %9 = arith.cmpi eq, %arg2, %c0_i32_8 : i32
    %10 = arith.extui %9 : i1 to i32
    %c0_i32_9 = arith.constant 0 : i32
    %11 = arith.cmpi ne, %10, %c0_i32_9 : i32
    scf.if %11 {
      %c0_10 = arith.constant 0 : index
      %c0_11 = arith.constant 0 : index
      %12 = vector.load %arg7[%c0_10, %c0_11] : memref<16x64xf32, #tpu.memory_space<vmem>>, vector<16x64xf32>
      %c0_12 = arith.constant 0 : index
      %c0_13 = arith.constant 0 : index
      %13 = vector.load %arg5[%c0_12, %c0_13] : memref<1x64xf32, #tpu.memory_space<vmem>>, vector<1x64xf32>
      %14 = vector.broadcast %13 : vector<1x64xf32> to vector<16x64xf32>
      %15 = arith.addf %12, %14 : vector<16x64xf32>
      %c0_14 = arith.constant 0 : index
      %c0_15 = arith.constant 0 : index
      %16 = vector.load %arg6[%c0_14, %c0_15] : memref<16x64xf32, #tpu.memory_space<vmem>>, vector<16x64xf32>
      tpu.vector_store %arg6[%c0_14, %c0_15], %15 {strides = array<i32>} : memref<16x64xf32, #tpu.memory_space<vmem>>, vector<16x64xf32>,
    } else {
    }
    return
  }
  func.func @transform_0(%arg0: i32, %arg1: i32, %arg2: i32) -> (i32, i32) {
    %c0_i32 = arith.constant 0 : i32
    return %arg0, %arg2 : i32, i32
  }
  func.func @transform_1(%arg0: i32, %arg1: i32, %arg2: i32) -> (i32, i32) {
    %c0_i32 = arith.constant 0 : i32
    return %arg1, %arg2 : i32, i32
  }
  func.func @transform_2(%arg0: i32, %arg1: i32, %arg2: i32) -> (i32, i32) {
    %c0_i32 = arith.constant 0 : i32
    %c0_i32_0 = arith.constant 0 : i32
    return %c0_i32, %arg1 : i32, i32
  }
  func.func @transform_3(%arg0: i32, %arg1: i32, %arg2: i32) -> (i32, i32) {
    %c0_i32 = arith.constant 0 : i32
    return %arg0, %arg1 : i32, i32
  }
}

</mosaic_0001>

<llo_original>
// kernel: tpu_custom_call.1
$region0: #{tpu_custom_call.1}
  #allocation0 [shape = 'u32[]', space=smem, size = 0x4, offset = 0x4, fixed_abs, tag = 'smem constant byte address 0x4 - core index']
  #allocation1 [shape = 'u32[72,128]{1,0:T(1,128)}', space=vmem, size = 0x9000, scoped, tag = 'internal scratch']
  #allocation2 [shape = 'f32[16,64]{1,0:T(8,128)}', space=vmem, size = 0x2000, scoped, tag = 'scratch operand']
  %s0 = inlined_call_operand.vmem [shape: f32[16,32], index: 0, kind: input, shape index: {}]
  %s1 = inlined_call_operand.vmem [shape: f32[64,32], index: 1, kind: input, shape index: {}]
  %s2 = inlined_call_operand.vmem [shape: f32[1,64], index: 2, kind: input, shape index: {}]
  %s3 = inlined_call_operand.hbm [shape: f32[16,64], index: 3, kind: output, shape index: {}]
  %s4 = sld [smem:[#allocation0]]
  $region30: #{tpu_custom_call.1} parent=0
    _
  %s6 = ssub.s32 1, %s4
  %s7 = scalar_select 0, %s6, %s4
  $region1: #{tpu_custom_call.1} parent=0
    #allocation3 [shape = 'u8[8192]{0}', space=vmem, size = 0x2000, scoped, tag = 'output window, operand 0, single buffered']
    #allocation4 [shape = 's32[1]{0}', space=sflag, size = 0x4, scoped, tag = 'scoped memory for tpu_custom_call.1']
    %8 = vsyncpa [#allocation4], 0
    // Predicated region
    $region2: #{tpu_custom_call.1} parent=1 // pred_check
      _
    $region3: #{tpu_custom_call.1} parent=1 // pred_check_branch
      %10 = sbr.rel (0) target = $region5
    $region4: #{tpu_custom_call.1} parent=1 // pred_region
      _
    $region5: #{tpu_custom_call.1} parent=1 // pred_fallthru
      _
    // Predicated region
    $region6: #{tpu_custom_call.1} parent=1 // pred_check
      _
    $region7: #{tpu_custom_call.1} parent=1 // pred_check_branch
      %12 = sbr.rel (0) target = $region9
    $region8: #{tpu_custom_call.1} parent=1 // pred_region
      _
    $region9: #{tpu_custom_call.1} parent=1 // pred_fallthru
      _
    // Predicated region
    $region10: #{tpu_custom_call.1} parent=1 // pred_check
      _
    $region11: #{tpu_custom_call.1} parent=1 // pred_check_branch
      %14 = sbr.rel (0) target = $region13
    $region12: #{tpu_custom_call.1} parent=1 // pred_region
      _
    $region13: #{tpu_custom_call.1} parent=1 // pred_fallthru
      _
    %p15 = scmp.eq.s32.totalorder 0, 0
    // Predicated region
    $region14: #{tpu_custom_call.1} parent=1 // pred_check
      %p16 = pneg %p15
    $region15: #{tpu_custom_call.1} parent=1 // pred_check_branch
      %18 = sbr.rel (%p16) target = $region17
    $region16: #{tpu_custom_call.1} parent=1 // pred_region
      %vm19 = vcmask 523264
      %20 = vst.msk [vmem:[#allocation2] sm:$0xff] %vm19, 0.0
      %21 = vst.msk [vmem:[#allocation2 + $0x8] sm:$0xff] %vm19, 0.0
    $region17: #{tpu_custom_call.1} parent=1 // pred_fallthru
      _
    %v22 = vld [vmem:[#allocation2] sm:$0xff]
    %v23 = vld [vmem:[#allocation2 + $0x8] sm:$0xff]
    %v24 = vld [vmem:[%s0] sm:$0xff]
    %v25 = vld [vmem:[%s0 + $0x8] sm:$0xff]
    %v26 = vld [vmem:[%s1] sm:$0xff]
    %v27 = vld [vmem:[%s1 + $0x8] sm:$0xff]
    %v28 = vld [vmem:[%s1 + $0x10] sm:$0xff]
    %v29 = vld [vmem:[%s1 + $0x18] sm:$0xff]
    %v30 = vld [vmem:[%s1 + $0x20] sm:$0xff]
    %v31 = vld [vmem:[%s1 + $0x28] sm:$0xff]
    %v32 = vld [vmem:[%s1 + $0x30] sm:$0xff]
    %v33 = vld [vmem:[%s1 + $0x38] sm:$0xff]
    %vm34 = vcmask 261120
    %v36 = vsel %vm34, %v24, 0
    %v39 = vsel %vm34, %v25, 0
    %v42 = vsel %vm34, %v26, 0
    %v45 = vsel %vm34, %v27, 0
    %v48 = vsel %vm34, %v28, 0
    %v51 = vsel %vm34, %v29, 0
    %v54 = vsel %vm34, %v30, 0
    %v57 = vsel %vm34, %v31, 0
    %v60 = vsel %vm34, %v32, 0
    %v63 = vsel %vm34, %v33, 0
    %65 = vmatpush.xpose.msra.mxu0 0.0
    %66 = vmatpush.xpose.msra.mxu0 0.0
    %67 = vmatpush.xpose.msra.mxu0 0.0
    %68 = vmatpush.xpose.msra.mxu0 0.0
    %69 = vmatpush.xpose.msra.mxu0 0.0
    %70 = vmatpush.xpose.msra.mxu0 0.0
    %71 = vmatpush.xpose.msra.mxu0 0.0
    %72 = vmatpush.xpose.msra.mxu0 0.0
    %73 = vmatpush.xpose.msra.mxu0 %v63
    %74 = vmatpush.xpose.msra.mxu0 %v60
    %75 = vmatpush.xpose.msra.mxu0 %v57
    %76 = vmatpush.xpose.msra.mxu0 %v54
    %77 = vmatpush.xpose.msra.mxu0 %v51
    %78 = vmatpush.xpose.msra.mxu0 %v48
    %79 = vmatpush.xpose.msra.mxu0 %v45
    %80 = vmatpush.xpose.msra.mxu0 %v42
    %81 = vmatmul.f32.gmra.mxu0 %v36
    %v82 = vpop.f32.mrf.mxu0
    %v83 = vadd.f32 0.0, %v82
    %84 = vmatmul.f32.gmra.mxu0 %v39
    %v85 = vpop.f32.mrf.mxu0
    %v86 = vadd.f32 0.0, %v85
    %87 = vdwg.mxu0
    %v88 = vadd.f32 %v22, %v83
    %v89 = vadd.f32 %v23, %v86
    %vm90 = vcmask 523264
    %91 = vst.msk [vmem:[#allocation2] sm:$0xff] %vm90, %v88
    %92 = vst.msk [vmem:[#allocation2 + $0x8] sm:$0xff] %vm90, %v89
    // Predicated region
    $region18: #{tpu_custom_call.1} parent=1 // pred_check
      %p93 = pneg %p15
    $region19: #{tpu_custom_call.1} parent=1 // pred_check_branch
      %95 = sbr.rel (%p93) target = $region21
    $region20: #{tpu_custom_call.1} parent=1 // pred_region
      %v96 = vld [vmem:[#allocation2] sm:$0xff]
      %v97 = vld [vmem:[#allocation2 + $0x8] sm:$0xff]
      %v98 = vld [vmem:[%s2] sm:$0x1]
      %v100 = vperm.slane %v98, 0
      %v102 = vadd.f32 %v96, %v100
      %v103 = vadd.f32 %v97, %v100
      %104 = vst.msk [vmem:[#allocation3] sm:$0xff] %vm90, %v102
      %105 = vst.msk [vmem:[#allocation3 + $0x8] sm:$0xff] %vm90, %v103
    $region21: #{tpu_custom_call.1} parent=1 // pred_fallthru
      _
    // Predicated region
    $region22: #{tpu_custom_call.1} parent=1 // pred_check
      _
    $region23: #{tpu_custom_call.1} parent=1 // pred_check_branch
      %107 = sbr.rel (0) target = $region25
    $region24: #{tpu_custom_call.1} parent=1 // pred_region
      %109 = vsyncadd [#allocation4], 0
      %s110 = sshll.u32 [#allocation3], 4
      %s111 = int_to_ptr.vmem [resolvable:$true] %s110
      %s112 = sshll.u32 %s3, 4
      %s113 = int_to_ptr.hbm [resolvable:$true] %s112
      %118 = dma.vmem_to_hbm [thread:$0]  %s111, 256, %s113, [#allocation4], 128, 128, 8
    $region25: #{tpu_custom_call.1} parent=1 // pred_fallthru
      _
    // Predicated region
    $region26: #{tpu_custom_call.1} parent=1 // pred_check
      _
    $region27: #{tpu_custom_call.1} parent=1 // pred_check_branch
      %120 = sbr.rel (0) target = $region29
    $region28: #{tpu_custom_call.1} parent=1 // pred_region
      %122 = dma.done [#allocation4], 256
    $region29: #{tpu_custom_call.1} parent=1 // pred_fallthru
      _
    %123 = vsyncpa [#allocation4], 1

</llo_original>
